<compile_context>
chip_gen: v7x
topology: tpu7x:2x2x1
jax: 0.10.0
libtpu: 0.0.40
codegen_flags: <defaults>
</compile_context>

<pallas_src>
import jax
import jax.numpy as jnp
from jax.experimental import pallas as pl
from jax.experimental.pallas import tpu as pltpu

LANES = 128              # vreg lane width
SUBLANES = 8             # vreg sublane count (f32)
MAX_BLOCK_ROWS = 4096    # 4096 * 128 * 4 B = 2 MiB per block: fits the scoped
                         # VMEM budget double-buffered on v5e / v6e / v7x
MIN_GRID_STEPS = 2       # keep both v7x TensorCores busy when batch is big enough
SMALL_ROWS = 2 * SUBLANES  # below this the ~0.35 us per-step overhead dominates;
                           # use a single block


def _round_up(n, m):
    return ((n + m - 1) // m) * m


def fma_kernel(x_ref, w_ref, b_ref, o_ref):
    # x_ref: (block_rows, 128) VMEM tile of flattened batch elements.
    # w_ref, b_ref: (1,) f32 scalars in SMEM.
    w = w_ref[0]
    b = b_ref[0]
    o_ref[...] = (x_ref[...].astype(jnp.float32) * w + b).astype(o_ref.dtype)


def simple_recommender_forward(x, weight, bias):
    """x: (B, 1); weight: (1, 1) (out, in); bias: (1,). Returns (B, 1)."""
    B, in_f = x.shape
    out_f = weight.shape[0]
    assert in_f == 1 and out_f == 1, "SimpleRecommender is nn.Linear(1, 1)"
    orig_dtype = x.dtype

    # ---- lane-dense re-layout of the batch: (B, 1) -> (rows, 128) ----
    # Fast path: B % 128 == 0 -> pure reshape, no pad / no output slice.
    flat = x.reshape(-1)                      # (B,)
    rows = pl.cdiv(B, LANES)
    pad_elems = rows * LANES - B
    if pad_elems:
        # Padded lanes evaluate to bias (0*w + b); they are sliced off below
        # and must never be reused as a zero-padded buffer.
        flat = jnp.pad(flat, (0, pad_elems))
    x2d = flat.reshape(rows, LANES)

    # ---- block sizing: ragged last block is masked by Pallas ----
    if rows <= SMALL_ROWS:
        # Tiny input: single block equal to the full row extent (legal even if
        # rows is not a multiple of 8, since it equals the full array dim).
        block_rows = rows
    else:
        # >= MIN_GRID_STEPS blocks (v7x megacore sharding), each a multiple of
        # 8 sublanes and at most 2 MiB.
        block_rows = min(MAX_BLOCK_ROWS,
                         _round_up(pl.cdiv(rows, MIN_GRID_STEPS), SUBLANES))
    grid = (pl.cdiv(rows, block_rows),)

    # ---- scalar parameters live in SMEM ----
    w_s = weight.reshape(1).astype(jnp.float32)
    b_s = bias.reshape(1).astype(jnp.float32)

    itemsize = jnp.dtype(orig_dtype).itemsize
    y2d = pl.pallas_call(
        fma_kernel,
        out_shape=jax.ShapeDtypeStruct((rows, LANES), orig_dtype),
        grid=grid,
        in_specs=[
            pl.BlockSpec((block_rows, LANES), lambda i: (i, 0)),
            pl.BlockSpec(memory_space=pltpu.MemorySpace.SMEM),
            pl.BlockSpec(memory_space=pltpu.MemorySpace.SMEM),
        ],
        out_specs=pl.BlockSpec((block_rows, LANES), lambda i: (i, 0)),
        compiler_params=pltpu.CompilerParams(
            dimension_semantics=("parallel",),
        ),
        cost_estimate=pl.CostEstimate(
            flops=2 * B,
            bytes_accessed=2 * B * itemsize,
            transcendentals=0,
        ),
    )(x2d, w_s, b_s)

    # Undo the lane-dense re-layout (and padding, only if it was needed).
    if pad_elems:
        return y2d.reshape(-1)[:B].reshape(B, out_f)
    return y2d.reshape(B, out_f)


if __name__ == "__main__":
    key = jax.random.PRNGKey(0)
    kx, kw, kb = jax.random.split(key, 3)

    # Deterministic parameters (nn.Linear(1, 1): weight (1, 1), bias (1,)).
    weight = jax.random.uniform(kw, (1, 1), jnp.float32, minval=-1.0, maxval=1.0)
    bias = jax.random.uniform(kb, (1,), jnp.float32, minval=-1.0, maxval=1.0)

    # Exercise: tiny ragged batch, aligned fast path, multi-block, ragged multi-block.
    for batch in (8, 1024, 4224, 5000):
        xb = jax.random.normal(jax.random.fold_in(kx, batch), (batch, 1), jnp.float32)
        out = jax.block_until_ready(simple_recommender_forward(xb, weight, bias))
        ref = xb @ weight.T + bias
        assert out.shape == (batch, 1), out.shape
        assert jnp.allclose(out, ref, atol=1e-6, rtol=1e-6), batch

    print("KERNEL_OK")
</pallas_src>

<mosaic_0001>
module attributes {stable_mosaic.version = 11 : i64} {
  func.func @fma_kernel(%arg0: i32, %arg1: memref<1x128xf32, #tpu.memory_space<vmem>>, %arg2: memref<1xf32, #tpu.memory_space<smem>>, %arg3: memref<1xf32, #tpu.memory_space<smem>>, %arg4: memref<1x128xf32, #tpu.memory_space<vmem>>) attributes {dimension_semantics = [#tpu.dimension_semantics<parallel>], iteration_bounds = array<i64: 1>, scalar_prefetch = 0 : i64, scratch_operands = 0 : i64, tpu.core_type = #tpu.core_type<tc>, window_params = [{transform_indices = @transform_0, window_bounds = array<i64: 1, 128>}, {transform_indices = @transform_1, window_bounds = array<i64: 1>}, {transform_indices = @transform_2, window_bounds = array<i64: 1>}, {transform_indices = @transform_3, window_bounds = array<i64: 1, 128>}]} {
    %c0 = arith.constant 0 : index
    %0 = memref.load %arg2[%c0] : memref<1xf32, #tpu.memory_space<smem>>
    %c0_0 = arith.constant 0 : index
    %1 = memref.load %arg3[%c0_0] : memref<1xf32, #tpu.memory_space<smem>>
    %c0_1 = arith.constant 0 : index
    %c0_2 = arith.constant 0 : index
    %2 = vector.load %arg1[%c0_1, %c0_2] : memref<1x128xf32, #tpu.memory_space<vmem>>, vector<1x128xf32>
    %3 = vector.broadcast %0 : f32 to vector<1x128xf32>
    %4 = arith.mulf %2, %3 : vector<1x128xf32>
    %5 = vector.broadcast %1 : f32 to vector<1x128xf32>
    %6 = arith.addf %4, %5 : vector<1x128xf32>
    %c0_3 = arith.constant 0 : index
    %c0_4 = arith.constant 0 : index
    %7 = vector.load %arg4[%c0_3, %c0_4] : memref<1x128xf32, #tpu.memory_space<vmem>>, vector<1x128xf32>
    tpu.vector_store %arg4[%c0_3, %c0_4], %6 {strides = array<i32>} : memref<1x128xf32, #tpu.memory_space<vmem>>, vector<1x128xf32>,
    return
  }
  func.func @transform_0(%arg0: i32) -> (i32, i32) {
    %c0_i32 = arith.constant 0 : i32
    %c0_i32_0 = arith.constant 0 : i32
    return %arg0, %c0_i32 : i32, i32
  }
  func.func @transform_1(%arg0: i32) -> i32 {
    %c0_i32 = arith.constant 0 : i32
    %c0_i32_0 = arith.constant 0 : i32
    return %c0_i32 : i32
  }
  func.func @transform_2(%arg0: i32) -> i32 {
    %c0_i32 = arith.constant 0 : i32
    %c0_i32_0 = arith.constant 0 : i32
    return %c0_i32 : i32
  }
  func.func @transform_3(%arg0: i32) -> (i32, i32) {
    %c0_i32 = arith.constant 0 : i32
    %c0_i32_0 = arith.constant 0 : i32
    return %arg0, %c0_i32 : i32, i32
  }
}

</mosaic_0001>

<llo_original>
// kernel: tpu_custom_call.1
$region0: #{tpu_custom_call.1}
  #allocation0 [shape = 'u32[]', space=smem, size = 0x4, offset = 0x4, fixed_abs, tag = 'smem constant byte address 0x4 - core index']
  #allocation1 [shape = 'u32[144,128]{1,0:T(1,128)}', space=vmem, size = 0x12000, scoped, tag = 'internal scratch']
  #allocation2 [shape = 'f32[1]{0:T(128)S(6)}', space=smem, size = 0x200, scoped, tag = 'scoped memory for tpu_custom_call.1']
  #allocation3 [shape = 'f32[1]{0:T(128)S(6)}', space=smem, size = 0x200, scoped, tag = 'scoped memory for tpu_custom_call.1']
  %s0 = inlined_call_operand.vmem [shape: f32[1,128], index: 0, kind: input, shape index: {}]
  %s1 = inlined_call_operand.<no memory space> [shape: f32[1], index: 1, kind: input, shape index: {}]
  %s2 = inlined_call_operand.<no memory space> [shape: f32[1], index: 2, kind: input, shape index: {}]
  %s3 = inlined_call_operand.hbm [shape: f32[1,128], index: 3, kind: output, shape index: {}]
  %s4 = sld [smem:[#allocation0]]
  $region22: #{tpu_custom_call.1} parent=0
    _
  %s6 = ssub.s32 1, %s4
  %s7 = scalar_select 0, %s6, %s4
  %8 = sst [smem:[#allocation2]] %s1
  %9 = sst [smem:[#allocation3]] %s2
  $region1: #{tpu_custom_call.1} parent=0
    #allocation4 [shape = 'u8[512]{0}', space=vmem, size = 0x400, scoped, tag = 'output window, operand 0, single buffered']
    #allocation5 [shape = 's32[1]{0}', space=sflag, size = 0x4, scoped, tag = 'scoped memory for tpu_custom_call.1']
    %10 = vsyncpa [#allocation5], 0
    // Predicated region
    $region2: #{tpu_custom_call.1} parent=1 // pred_check
      _
    $region3: #{tpu_custom_call.1} parent=1 // pred_check_branch
      %12 = sbr.rel (0) target = $region5
    $region4: #{tpu_custom_call.1} parent=1 // pred_region
      _
    $region5: #{tpu_custom_call.1} parent=1 // pred_fallthru
      _
    // Predicated region
    $region6: #{tpu_custom_call.1} parent=1 // pred_check
      _
    $region7: #{tpu_custom_call.1} parent=1 // pred_check_branch
      %14 = sbr.rel (0) target = $region9
    $region8: #{tpu_custom_call.1} parent=1 // pred_region
      _
    $region9: #{tpu_custom_call.1} parent=1 // pred_fallthru
      _
    // Predicated region
    $region10: #{tpu_custom_call.1} parent=1 // pred_check
      _
    $region11: #{tpu_custom_call.1} parent=1 // pred_check_branch
      %16 = sbr.rel (0) target = $region13
    $region12: #{tpu_custom_call.1} parent=1 // pred_region
      _
    $region13: #{tpu_custom_call.1} parent=1 // pred_fallthru
      _
    %s17 = sld [smem:[#allocation2]]
    %s18 = sld [smem:[#allocation3]]
    %v19 = vld [vmem:[%s0] sm:$0x1]
    %v20 = vstv %s17
    %v21 = vmul.f32 %v19, %v20
    %v22 = vstv %s18
    %v23 = vadd.f32 %v21, %v22
    %24 = vst [vmem:[#allocation4] sm:$0x1] %v23
    // Predicated region
    $region14: #{tpu_custom_call.1} parent=1 // pred_check
      _
    $region15: #{tpu_custom_call.1} parent=1 // pred_check_branch
      %26 = sbr.rel (0) target = $region17
    $region16: #{tpu_custom_call.1} parent=1 // pred_region
      %s28 = ssub.s32 16, 16
      %29 = vsyncadd [#allocation5], %s28
      %s31 = sshll.u32 [#allocation4], 4
      %s32 = int_to_ptr.vmem [resolvable:$true] %s31
      %34 = dma.vmem_to_hbm [thread:$0]  %s32, 16, %s3, [#allocation5]
    $region17: #{tpu_custom_call.1} parent=1 // pred_fallthru
      _
    // Predicated region
    $region18: #{tpu_custom_call.1} parent=1 // pred_check
      _
    $region19: #{tpu_custom_call.1} parent=1 // pred_check_branch
      %36 = sbr.rel (0) target = $region21
    $region20: #{tpu_custom_call.1} parent=1 // pred_region
      %37 = dma.done [#allocation5], 16
    $region21: #{tpu_custom_call.1} parent=1 // pred_fallthru
      _
    %38 = vsyncpa [#allocation5], 1

</llo_original>
